<compile_context>
chip_gen: v5e
topology: v5e:2x2
jax: 0.10.0
libtpu: 0.0.40
codegen_flags: <defaults>
</compile_context>

<pallas_src>
import jax
import jax.numpy as jnp
from jax.experimental import pallas as pl
from jax.experimental.pallas import tpu as pltpu

_LANE = 128        # lane width (last-dim granule)
_SUBLANE_F32 = 8   # f32 sublane granule (second-to-last dim)


def _round_up(x, m):
    return ((x + m - 1) // m) * m


def _sublane_granule(dtype):
    # 8 rows for 4-byte dtypes, 16 for 2-byte (bf16), 32 for 1-byte (int8/fp8).
    itemsize = jnp.dtype(dtype).itemsize
    return (4 // itemsize) * _SUBLANE_F32


def _vmem_budget_bytes():
    """Generation-aware scoped-VMEM budget: 3/4 of physical, capped at 64 MiB.

    v5e/v6e (128 MiB physical) -> 64 MiB; v7x (64 MiB per TC) -> 48 MiB.
    """
    cap = 64 * 1024 * 1024  # conservative fallback (v7x per-TC physical)
    try:
        cap = int(pltpu.get_tpu_info().vmem_capacity_bytes)
    except Exception:
        pass
    return min((cap * 3) // 4, 64 * 1024 * 1024)


def _linear_kernel(x_ref, w_ref, b_ref, o_ref):
    # x_ref: (TM, H) pipelined tile; w_ref: (H, C_pad) resident;
    # b_ref: (1, C_pad) resident f32; o_ref: (TM, C_pad).
    acc = jnp.dot(x_ref[...], w_ref[...], preferred_element_type=jnp.float32)
    o_ref[...] = (acc + b_ref[...]).astype(o_ref.dtype)


def prepare_pooler_start_logits_params(weight, bias, compute_dtype=None):
    """One-time param prep (do this at model init, not per call).

    weight: (C, H) PyTorch nn.Linear layout; bias: (C,).
    compute_dtype: dtype of the activations (weight is cast to it so the MXU
      takes the native path, e.g. bf16 x bf16 -> f32).
    Returns w_t_pad: (H, C_pad=128) zero-padded transposed weight,
            b_pad:   (1, C_pad) zero-padded f32 bias (added post-accumulate).
    """
    C, H = weight.shape
    if compute_dtype is None:
        compute_dtype = weight.dtype
    c_pad = _round_up(max(C, _LANE), _LANE)  # keep C_pad at 128 for small C
    w_t_pad = (jnp.zeros((H, c_pad), compute_dtype)
               .at[:, :C].set(weight.T.astype(compute_dtype)))
    b_pad = (jnp.zeros((1, c_pad), jnp.float32)
             .at[0, :C].set(bias.astype(jnp.float32)))
    return w_t_pad, b_pad


def _pick_row_tile(rows, H, c_pad, x_dtype, w_dtype, max_block_rows, budget):
    """Largest sublane-aligned row tile that fits the VMEM budget."""
    sub = _sublane_granule(x_dtype)
    x_item = jnp.dtype(x_dtype).itemsize
    w_item = jnp.dtype(w_dtype).itemsize
    # Resident bytes: weight + bias, counted as double-buffered (safe bound).
    resident = 2 * H * c_pad * w_item + 2 * _SUBLANE_F32 * c_pad * 4
    # Per-row bytes: double-buffered x tile + double-buffered output tile.
    per_row = 2 * (H * x_item + c_pad * x_item)
    usable = budget - resident - (2 << 20)  # ~2 MiB compiler-scratch headroom
    usable = max(usable, per_row * sub)
    tm = min(max_block_rows, usable // per_row, _round_up(rows, sub))
    tm = max(sub, (tm // sub) * sub)
    return tm


def pooler_start_logits_padded(hidden_states, w_t_pad, b_pad, num_classes,
                               p_mask=None, max_block_rows=2048,
                               slice_output=True, core_parallel=False):
    """hidden_states: (B, S, H); w_t_pad: (H, C_pad); b_pad: (1, C_pad) f32.

    slice_output=False returns the lane-padded (B, S, C_pad) result (padded
    columns are exact zeros) so a consumer can fuse the slice away.
    core_parallel=True shards the row grid across TensorCores (use on v7x).
    """
    del p_mask  # unused in the reference forward
    B, S, H = hidden_states.shape
    C_pad = w_t_pad.shape[1]
    rows = B * S
    x2d = hidden_states.reshape(rows, H)

    x_item = jnp.dtype(hidden_states.dtype).itemsize
    w_item = jnp.dtype(w_t_pad.dtype).itemsize

    budget = _vmem_budget_bytes()
    tm = _pick_row_tile(rows, H, C_pad, hidden_states.dtype, w_t_pad.dtype,
                        max_block_rows, budget)

    grid = (pl.cdiv(rows, tm),)  # ragged last block; no activation padding

    cost = pl.CostEstimate(
        flops=2 * rows * H * C_pad,
        transcendentals=0,
        bytes_accessed=(rows * H * x_item
                        + H * C_pad * w_item
                        + rows * C_pad * x_item),
    )

    dims = (pltpu.CORE_PARALLEL,) if core_parallel else ("parallel",)

    out2d = pl.pallas_call(
        _linear_kernel,
        out_shape=jax.ShapeDtypeStruct((rows, C_pad), hidden_states.dtype),
        grid_spec=pltpu.PrefetchScalarGridSpec(
            num_scalar_prefetch=0,
            grid=grid,
            in_specs=[
                pl.BlockSpec((tm, H), lambda i: (i, 0)),      # x tile (pipelined)
                pl.BlockSpec((H, C_pad), lambda i: (0, 0)),   # weight (resident)
                pl.BlockSpec((1, C_pad), lambda i: (0, 0)),   # bias (resident)
            ],
            out_specs=pl.BlockSpec((tm, C_pad), lambda i: (i, 0)),
        ),
        compiler_params=pltpu.CompilerParams(
            dimension_semantics=dims,
            vmem_limit_bytes=budget,
        ),
        cost_estimate=cost,
    )(x2d, w_t_pad, b_pad)

    out3d = out2d.reshape(B, S, C_pad)
    if slice_output:
        return out3d[..., :num_classes]
    return out3d


def pooler_start_logits(hidden_states, weight, bias, p_mask=None):
    """Convenience wrapper taking PyTorch-layout params directly.

    hidden_states: (B, S, H); weight: (C, H); bias: (C,).
    In a real model, call prepare_pooler_start_logits_params once at init and
    use pooler_start_logits_padded per step to avoid the per-call transpose.
    """
    w_t_pad, b_pad = prepare_pooler_start_logits_params(
        weight, bias, compute_dtype=hidden_states.dtype)
    return pooler_start_logits_padded(hidden_states, w_t_pad, b_pad,
                                      weight.shape[0], p_mask)


if __name__ == "__main__":
    # Small shapes implied by the module: (batch, seq, hidden) -> num_classes
    batch, seq, hidden, num_classes = 2, 8, 32, 4

    key = jax.random.PRNGKey(0)
    k_x, k_w, k_b = jax.random.split(key, 3)

    hidden_states = jax.random.normal(k_x, (batch, seq, hidden),
                                      dtype=jnp.float32)
    # Deterministic "nn.Linear"-style params: weight (C, H), bias (C,)
    bound = 1.0 / (hidden ** 0.5)
    weight = jax.random.uniform(k_w, (num_classes, hidden),
                                minval=-bound, maxval=bound, dtype=jnp.float32)
    bias = jax.random.uniform(k_b, (num_classes,),
                              minval=-bound, maxval=bound, dtype=jnp.float32)

    # f32 path
    out = pooler_start_logits(hidden_states, weight, bias)
    out = jax.block_until_ready(out)
    ref = hidden_states @ weight.T + bias
    assert out.shape == (batch, seq, num_classes)
    assert jnp.allclose(out, ref, atol=1e-5, rtol=1e-5)

    # bf16 end-to-end path (dtype-dependent sublane granule, native MXU path)
    hs_bf16 = hidden_states.astype(jnp.bfloat16)
    out_bf16 = pooler_start_logits(hs_bf16, weight, bias)
    out_bf16 = jax.block_until_ready(out_bf16)
    assert out_bf16.shape == (batch, seq, num_classes)
    assert out_bf16.dtype == jnp.bfloat16
    assert jnp.allclose(out_bf16.astype(jnp.float32), ref, atol=5e-2, rtol=5e-2)

    print("KERNEL_OK")
</pallas_src>

<mosaic_0001>
module attributes {stable_mosaic.version = 11 : i64} {
  func.func @_linear_kernel(%arg0: i32, %arg1: memref<16x32xf32, #tpu.memory_space<vmem>>, %arg2: memref<32x128xf32, #tpu.memory_space<vmem>>, %arg3: memref<1x128xf32, #tpu.memory_space<vmem>>, %arg4: memref<16x128xf32, #tpu.memory_space<vmem>>) attributes {dimension_semantics = [#tpu.dimension_semantics<parallel>], iteration_bounds = array<i64: 1>, scalar_prefetch = 0 : i64, scratch_operands = 0 : i64, tpu.core_type = #tpu.core_type<tc>, window_params = [{transform_indices = @transform_0, window_bounds = array<i64: 16, 32>}, {pipeline_mode = #tpu.pipeline_mode<synchronous>, transform_indices = @transform_1, window_bounds = array<i64: 32, 128>}, {pipeline_mode = #tpu.pipeline_mode<synchronous>, transform_indices = @transform_2, window_bounds = array<i64: 1, 128>}, {transform_indices = @transform_3, window_bounds = array<i64: 16, 128>}]} {
    %c0 = arith.constant 0 : index
    %c0_0 = arith.constant 0 : index
    %0 = vector.load %arg1[%c0, %c0_0] : memref<16x32xf32, #tpu.memory_space<vmem>>, vector<16x32xf32>
    %c0_1 = arith.constant 0 : index
    %c0_2 = arith.constant 0 : index
    %1 = vector.load %arg2[%c0_1, %c0_2] : memref<32x128xf32, #tpu.memory_space<vmem>>, vector<32x128xf32>
    %cst = arith.constant dense<0.000000e+00> : vector<16x128xf32>
    %2 = tpu.matmul %0, %1, %cst {dimension_numbers = #tpu.dot_dimension_numbers<[1], [0], [0], [1], [0, 0, 1, 1], [], []>} : vector<16x32xf32>, vector<32x128xf32>, vector<16x128xf32> -> vector<16x128xf32>
    %c0_3 = arith.constant 0 : index
    %c0_4 = arith.constant 0 : index
    %3 = vector.load %arg3[%c0_3, %c0_4] : memref<1x128xf32, #tpu.memory_space<vmem>>, vector<1x128xf32>
    %4 = vector.broadcast %3 : vector<1x128xf32> to vector<16x128xf32>
    %5 = arith.addf %2, %4 : vector<16x128xf32>
    %c0_5 = arith.constant 0 : index
    %c0_6 = arith.constant 0 : index
    %6 = vector.load %arg4[%c0_5, %c0_6] : memref<16x128xf32, #tpu.memory_space<vmem>>, vector<16x128xf32>
    tpu.vector_store %arg4[%c0_5, %c0_6], %5 {strides = array<i32>} : memref<16x128xf32, #tpu.memory_space<vmem>>, vector<16x128xf32>,
    return
  }
  func.func @transform_0(%arg0: i32) -> (i32, i32) {
    %c0_i32 = arith.constant 0 : i32
    %c0_i32_0 = arith.constant 0 : i32
    return %arg0, %c0_i32 : i32, i32
  }
  func.func @transform_1(%arg0: i32) -> (i32, i32) {
    %c0_i32 = arith.constant 0 : i32
    %c0_i32_0 = arith.constant 0 : i32
    %c0_i32_1 = arith.constant 0 : i32
    return %c0_i32, %c0_i32_0 : i32, i32
  }
  func.func @transform_2(%arg0: i32) -> (i32, i32) {
    %c0_i32 = arith.constant 0 : i32
    %c0_i32_0 = arith.constant 0 : i32
    %c0_i32_1 = arith.constant 0 : i32
    return %c0_i32, %c0_i32_0 : i32, i32
  }
  func.func @transform_3(%arg0: i32) -> (i32, i32) {
    %c0_i32 = arith.constant 0 : i32
    %c0_i32_0 = arith.constant 0 : i32
    return %arg0, %c0_i32 : i32, i32
  }
}

</mosaic_0001>

<llo_original>
// kernel: tpu_custom_call.1
$region0: #{tpu_custom_call.1}
  #allocation0 [shape = 'u32[]', space=smem, size = 0x4, offset = 0x4, fixed_abs, tag = 'smem constant byte address 0x4 - core index']
  #allocation1 [shape = 'u32[72,128]{1,0:T(1,128)}', space=vmem, size = 0x9000, scoped, tag = 'internal scratch']
  %s0 = inlined_call_operand.hbm [shape: f32[16,32], index: 0, kind: input, shape index: {}]
  %s1 = inlined_call_operand.hbm [shape: f32[32,128], index: 1, kind: input, shape index: {}]
  %s2 = inlined_call_operand.vmem [shape: f32[1,128], index: 2, kind: input, shape index: {}]
  %s3 = inlined_call_operand.hbm [shape: f32[16,128], index: 3, kind: output, shape index: {}]
  %s4 = sld [smem:[#allocation0]]
  $region30: #{tpu_custom_call.1} parent=0
    _
  %s6 = ssub.s32 1, %s4
  %s7 = scalar_select 0, %s6, %s4
  $region1: #{tpu_custom_call.1} parent=0
    #allocation2 [shape = 'u8[8192]{0}', space=vmem, size = 0x2000, scoped, tag = 'input window, operand 0, single buffered']
    #allocation3 [shape = 's32[1]{0}', space=sflag, size = 0x4, scoped, tag = 'scoped memory for tpu_custom_call.1']
    #allocation4 [shape = 's32[1]{0}', space=sflag, size = 0x4, scoped, tag = 'scoped memory for tpu_custom_call.1']
    #allocation5 [shape = 'u8[16384]{0}', space=vmem, size = 0x4000, scoped, tag = 'input window, operand 1, single buffered']
    #allocation6 [shape = 's32[1]{0}', space=sflag, size = 0x4, scoped, tag = 'scoped memory for tpu_custom_call.1']
    #allocation7 [shape = 'u8[8192]{0}', space=vmem, size = 0x2000, scoped, tag = 'output window, operand 0, single buffered']
    %8 = vsyncpa [#allocation3], 0
    %9 = vsyncpa [#allocation6], 0
    %10 = vsyncpa [#allocation4], 0
    // Predicated region
    $region2: #{tpu_custom_call.1} parent=1 // pred_check
      _
    $region3: #{tpu_custom_call.1} parent=1 // pred_check_branch
      %12 = sbr.rel (0) target = $region5
    $region4: #{tpu_custom_call.1} parent=1 // pred_region
      %14 = vsyncadd [#allocation3], 0
      %s15 = sshll.u32 %s0, 4
      %s16 = int_to_ptr.hbm [resolvable:$true] %s15
      %s17 = sshll.u32 [#allocation2], 4
      %s18 = int_to_ptr.vmem [resolvable:$true] %s17
      %23 = dma.hbm_to_vmem [thread:$0]  %s16, 256, %s18, [#allocation3], 128, 128, 8
    $region5: #{tpu_custom_call.1} parent=1 // pred_fallthru
      _
    // Predicated region
    $region6: #{tpu_custom_call.1} parent=1 // pred_check
      _
    $region7: #{tpu_custom_call.1} parent=1 // pred_check_branch
      %25 = sbr.rel (0) target = $region9
    $region8: #{tpu_custom_call.1} parent=1 // pred_region
      %27 = vsyncadd [#allocation6], 0
      %s28 = sshll.u32 %s1, 4
      %s29 = int_to_ptr.hbm [resolvable:$true] %s28
      %s30 = sshll.u32 [#allocation5], 4
      %s31 = int_to_ptr.vmem [resolvable:$true] %s30
      %36 = dma.hbm_to_vmem [thread:$0]  %s29, 512, %s31, [#allocation6], 128, 128, 8
    $region9: #{tpu_custom_call.1} parent=1 // pred_fallthru
      _
    // Predicated region
    $region10: #{tpu_custom_call.1} parent=1 // pred_check
      _
    $region11: #{tpu_custom_call.1} parent=1 // pred_check_branch
      %38 = sbr.rel (0) target = $region13
    $region12: #{tpu_custom_call.1} parent=1 // pred_region
      _
    $region13: #{tpu_custom_call.1} parent=1 // pred_fallthru
      _
    // Predicated region
    $region14: #{tpu_custom_call.1} parent=1 // pred_check
      _
    $region15: #{tpu_custom_call.1} parent=1 // pred_check_branch
      %40 = sbr.rel (0) target = $region17
    $region16: #{tpu_custom_call.1} parent=1 // pred_region
      %42 = dma.done [#allocation3], 256
    $region17: #{tpu_custom_call.1} parent=1 // pred_fallthru
      _
    // Predicated region
    $region18: #{tpu_custom_call.1} parent=1 // pred_check
      _
    $region19: #{tpu_custom_call.1} parent=1 // pred_check_branch
      %44 = sbr.rel (0) target = $region21
    $region20: #{tpu_custom_call.1} parent=1 // pred_region
      %46 = dma.done [#allocation6], 512
    $region21: #{tpu_custom_call.1} parent=1 // pred_fallthru
      _
    %v47 = vld [vmem:[#allocation2] sm:$0xff]
    %v48 = vld [vmem:[#allocation2 + $0x8] sm:$0xff]
    %v49 = vld [vmem:[#allocation5] sm:$0xff]
    %v50 = vld [vmem:[#allocation5 + $0x8] sm:$0xff]
    %v51 = vld [vmem:[#allocation5 + $0x10] sm:$0xff]
    %v52 = vld [vmem:[#allocation5 + $0x18] sm:$0xff]
    %v53 = vld [vmem:[%s2] sm:$0x1]
    %v55 = vperm.slane %v53, 0
    %vm57 = vcmask 261120
    %v59 = vsel %vm57, %v47, 0
    %v62 = vsel %vm57, %v48, 0
    %64 = vmatpush.msra.mxu0 0.0
    %65 = vmatpush.msra.mxu0 0.0
    %66 = vmatpush.msra.mxu0 0.0
    %67 = vmatpush.msra.mxu0 0.0
    %68 = vmatpush.msra.mxu0 0.0
    %69 = vmatpush.msra.mxu0 0.0
    %70 = vmatpush.msra.mxu0 0.0
    %71 = vmatpush.msra.mxu0 0.0
    %72 = vmatpush.msra.mxu0 0.0
    %73 = vmatpush.msra.mxu0 0.0
    %74 = vmatpush.msra.mxu0 0.0
    %75 = vmatpush.msra.mxu0 0.0
    %76 = vmatpush.msra.mxu0 %v52
    %77 = vmatpush.msra.mxu0 %v51
    %78 = vmatpush.msra.mxu0 %v50
    %79 = vmatpush.msra.mxu0 %v49
    %80 = vmatmul.f32.gmra.mxu0 %v59
    %v81 = vpop.f32.mrf.mxu0
    %v82 = vadd.f32 %v55, %v81
    %83 = vmatmul.f32.gmra.mxu0 %v62
    %v84 = vpop.f32.mrf.mxu0
    %v85 = vadd.f32 %v55, %v84
    %86 = vdwg.mxu0
    %87 = vst [vmem:[#allocation7] sm:$0xff] %v82
    %88 = vst [vmem:[#allocation7 + $0x8] sm:$0xff] %v85
    // Predicated region
    $region22: #{tpu_custom_call.1} parent=1 // pred_check
      _
    $region23: #{tpu_custom_call.1} parent=1 // pred_check_branch
      %90 = sbr.rel (0) target = $region25
    $region24: #{tpu_custom_call.1} parent=1 // pred_region
      %92 = vsyncadd [#allocation4], 0
      %s93 = sshll.u32 [#allocation7], 4
      %s94 = int_to_ptr.vmem [resolvable:$true] %s93
      %s95 = sshll.u32 %s3, 4
      %s96 = int_to_ptr.hbm [resolvable:$true] %s95
      %101 = dma.vmem_to_hbm [thread:$0]  %s94, 256, %s96, [#allocation4], 128, 128, 8
    $region25: #{tpu_custom_call.1} parent=1 // pred_fallthru
      _
    // Predicated region
    $region26: #{tpu_custom_call.1} parent=1 // pred_check
      _
    $region27: #{tpu_custom_call.1} parent=1 // pred_check_branch
      %103 = sbr.rel (0) target = $region29
    $region28: #{tpu_custom_call.1} parent=1 // pred_region
      %105 = dma.done [#allocation4], 256
    $region29: #{tpu_custom_call.1} parent=1 // pred_fallthru
      _
    %106 = vsyncpa [#allocation3], 1
    %107 = vsyncpa [#allocation6], 1
    %108 = vsyncpa [#allocation4], 1

</llo_original>
